<compile_context>
chip_gen: v7x
topology: tpu7x:2x2x1
jax: 0.10.0
libtpu: 0.0.40
codegen_flags: <defaults>
</compile_context>

<pallas_src>
import functools

import jax
import jax.numpy as jnp
from jax.experimental import pallas as pl
from jax.experimental.pallas import tpu as pltpu


_VMEM_LIMIT = 64 * 1024 * 1024   # explicit scoped-VMEM budget; <= physical on every gen


# ---------------- Pallas kernels ----------------

def _qkv_proj_kernel(x_ref, w_ref, b_ref, o_ref):
    # one (TM, H) row-tile x one (H, TN) column-tile of the fused Q|K|V weight.
    acc = jnp.dot(x_ref[...], w_ref[...], preferred_element_type=jnp.float32)
    o_ref[...] = (acc + b_ref[...]).astype(o_ref.dtype)


def _attn_kernel(scale, approx, q_ref, k_ref, v_ref, m_ref, attn_ref, ctx_ref):
    # one (batch, head, query-tile) per grid step.
    q = q_ref[0, 0] * scale                                 # (TQ, D), scale folded into q
    k = k_ref[0, 0]                                         # (L,  D)
    v = v_ref[0, 0]                                         # (L,  D)

    # scores: contract on D directly (no explicit transpose of k)
    s = jax.lax.dot_general(q, k, (((1,), (1,)), ((), ())),
                            preferred_element_type=jnp.float32)     # (TQ, L)

    # mask block already carries the quirky (b*head_num + h) % B batch via its
    # BlockSpec index_map; int8, nonzero == masked (torch masked_fill_(-inf)).
    s = jnp.where(m_ref[0] != 0, jnp.float32(-jnp.inf), s)

    smax = jnp.max(s, axis=-1, keepdims=True)
    p = jnp.exp(s - smax)
    denom = jnp.sum(p, axis=-1, keepdims=True)
    a = p * pl.reciprocal(denom, approx=approx)             # softmax(dim=-1)

    attn_ref[0, 0] = a                                      # returned by the module (f32)
    ctx = jnp.dot(a.astype(v.dtype), v, preferred_element_type=jnp.float32)
    ctx_ref[0, 0] = ctx.astype(ctx_ref.dtype)


def _out_proj_kernel(ctx_ref, w_ref, b_ref, npm_ref, x_ref, g_ref, o_ref):
    # one (TM, H) x (H, TN) tile: out proj + non_pad_mask + gated residual.
    y = jnp.dot(ctx_ref[...], w_ref[...], preferred_element_type=jnp.float32)
    y = (y + b_ref[...]) * npm_ref[...]
    o_ref[...] = g_ref[0] * y + x_ref[...]                  # gamma scalar from SMEM


# ---------------- wrapper ----------------

def multi_attn_forward(params, x, attn_mask, non_pad_mask, head_num,
                       compute_dtype=jnp.bfloat16):
    B, L, H = x.shape
    D = H // head_num
    scale = float(D) ** (-0.5)
    approx = jnp.dtype(compute_dtype) != jnp.dtype(jnp.float32)

    wq, bq, wk, bk, wv, bv, wo, bo, gamma = params
    w_qkv = jnp.concatenate([wq, wk, wv], axis=1).astype(compute_dtype)   # (H, 3H)
    b_qkv = jnp.concatenate([bq, bk, bv]).reshape(1, 3 * H).astype(jnp.float32)
    wo_c = wo.astype(compute_dtype)
    bo2 = bo.reshape(1, H).astype(jnp.float32)
    gamma1 = gamma.reshape(1).astype(jnp.float32)
    mask_i8 = attn_mask.astype(jnp.int8)                    # nonzero == masked

    R = B * L
    x2 = x.reshape(R, H).astype(jnp.float32)                # f32 kept for the residual
    x_mm = x2.astype(compute_dtype)                         # MXU operand

    # fixed large row tile; Pallas masks the edge block (no divisor search).
    TM = R if R <= 512 else 512
    TN_QKV = 3 * H if 3 * H <= 512 else 512
    nr = pl.cdiv(R, TM)

    # --- fused Q|K|V projection, row tiles x weight-column tiles ---
    qkv = pl.pallas_call(
        _qkv_proj_kernel,
        grid=(nr, pl.cdiv(3 * H, TN_QKV)),
        in_specs=[pl.BlockSpec((TM, H), lambda i, j: (i, 0)),
                  pl.BlockSpec((H, TN_QKV), lambda i, j: (0, j)),
                  pl.BlockSpec((1, TN_QKV), lambda i, j: (0, j))],
        out_specs=pl.BlockSpec((TM, TN_QKV), lambda i, j: (i, j)),
        out_shape=jax.ShapeDtypeStruct((R, 3 * H), compute_dtype),
        compiler_params=pltpu.CompilerParams(
            dimension_semantics=("parallel", "parallel"),
            vmem_limit_bytes=_VMEM_LIMIT),
    )(x_mm, w_qkv, b_qkv)

    # exact torch semantics: w_qs(x).view(B*head_num, L, head_dim) is a
    # row-major reinterpretation; grouped here as (B, head_num, L, D).
    # TODO(synk): this reshape interleaves seq/channels -> one XLA relayout copy.
    q4 = qkv[:, :H].reshape(B, head_num, L, D)
    k4 = qkv[:, H:2 * H].reshape(B, head_num, L, D)
    v4 = qkv[:, 2 * H:].reshape(B, head_num, L, D)

    TQ = L if L <= 256 else 256
    nq = pl.cdiv(L, TQ)

    q_spec = pl.BlockSpec((1, 1, TQ, D), lambda b, h, qi: (b, h, qi, 0))
    kv_spec = pl.BlockSpec((1, 1, L, D), lambda b, h, qi: (b, h, 0, 0))
    # quirky torch attn_mask.repeat(head_num,1,1) indexing lives in the index_map.
    mask_spec = pl.BlockSpec((1, TQ, L),
                             lambda b, h, qi: ((b * head_num + h) % B, qi, 0))
    attn_spec = pl.BlockSpec((1, 1, TQ, L), lambda b, h, qi: (b, h, qi, 0))
    ctx_spec = pl.BlockSpec((1, 1, TQ, D), lambda b, h, qi: (b, h, qi, 0))

    # --- scaled masked attention + context, grid over (batch, head, q-tile) ---
    attn5, ctx5 = pl.pallas_call(
        functools.partial(_attn_kernel, scale, approx),
        grid=(B, head_num, nq),
        in_specs=[q_spec, kv_spec, kv_spec, mask_spec],
        out_specs=[attn_spec, ctx_spec],
        out_shape=[jax.ShapeDtypeStruct((B, head_num, L, L), jnp.float32),
                   jax.ShapeDtypeStruct((B, head_num, L, D), compute_dtype)],
        compiler_params=pltpu.CompilerParams(
            dimension_semantics=("parallel", "parallel", "parallel"),
            vmem_limit_bytes=_VMEM_LIMIT),
    )(q4, k4, v4, mask_i8)

    attn = attn5.reshape(B * head_num, L, L)                # pure view (leading dims merge)
    # TODO(synk): torch out.view(B, L, H) relayout -> one XLA relayout copy
    # (done in compute_dtype so the extra HBM round trip is halved in bf16).
    ctx2 = ctx5.reshape(R, H)
    npm2 = non_pad_mask.reshape(R, 1).astype(jnp.float32)

    TN_O = H if H <= 512 else 512

    # --- output projection + non-pad mask + gated residual over row tiles ---
    out2 = pl.pallas_call(
        _out_proj_kernel,
        grid=(nr, pl.cdiv(H, TN_O)),
        in_specs=[pl.BlockSpec((TM, H), lambda i, j: (i, 0)),
                  pl.BlockSpec((H, TN_O), lambda i, j: (0, j)),
                  pl.BlockSpec((1, TN_O), lambda i, j: (0, j)),
                  pl.BlockSpec((TM, 1), lambda i, j: (i, 0)),
                  pl.BlockSpec((TM, TN_O), lambda i, j: (i, j)),
                  pl.BlockSpec(memory_space=pltpu.MemorySpace.SMEM)],
        out_specs=pl.BlockSpec((TM, TN_O), lambda i, j: (i, j)),
        out_shape=jax.ShapeDtypeStruct((R, H), jnp.float32),
        compiler_params=pltpu.CompilerParams(
            dimension_semantics=("parallel", "parallel"),
            vmem_limit_bytes=_VMEM_LIMIT),
    )(ctx2, wo_c, bo2, npm2, x2, gamma1)

    return out2.reshape(B, L, H), attn


# ---------------- pure-JAX reference (for verification) ----------------

def multi_attn_reference(params, x, attn_mask, non_pad_mask, head_num):
    wq, bq, wk, bk, wv, bv, wo, bo, gamma = params
    B, L, H = x.shape
    D = H // head_num
    q = (x @ wq + bq).reshape(B * head_num, L, D)
    k = (x @ wk + bk).reshape(B * head_num, L, D)
    v = (x @ wv + bv).reshape(B * head_num, L, D)
    mask = jnp.tile(attn_mask, (head_num, 1, 1))
    s = (D ** -0.5) * jnp.einsum("bld,bmd->blm", q, k)
    s = jnp.where(mask, -jnp.inf, s)
    a = jax.nn.softmax(s, axis=-1)
    ctx = jnp.einsum("blm,bmd->bld", a, v).reshape(B, L, H)
    out = ctx @ wo + bo
    out = non_pad_mask * out
    out = gamma * out + x
    return out, a


if __name__ == "__main__":
    B, L, H, head_num = 2, 8, 32, 4   # head_dim = 8

    key = jax.random.PRNGKey(0)
    ks = jax.random.split(key, 10)
    x = jax.random.normal(ks[0], (B, L, H), jnp.float32)

    def lin(kw, kb):
        w = 0.1 * jax.random.normal(kw, (H, H), jnp.float32)   # pre-transposed (H_in, H_out)
        b = 0.05 * jax.random.normal(kb, (H,), jnp.float32)
        return w, b

    wq, bq = lin(ks[1], ks[2])
    wk, bk = lin(ks[3], ks[4])
    wv, bv = lin(ks[5], ks[6])
    wo, bo = lin(ks[7], ks[8])
    # gamma shape (1,) as in __init__; nonzero so the gated-residual path is exercised.
    gamma = jnp.array([0.5], jnp.float32)
    params = (wq, bq, wk, bk, wv, bv, wo, bo, gamma)

    # key-padding style masks: batch 0 uses all 8 positions, batch 1 pads last 2
    lengths = jnp.array([L, L - 2])
    key_pad = jnp.arange(L)[None, :] >= lengths[:, None]            # (B, L) bool
    attn_mask = jnp.broadcast_to(key_pad[:, None, :], (B, L, L))    # True = masked
    non_pad_mask = (~key_pad).astype(jnp.float32)[:, :, None]       # (B, L, 1)

    out_ref, attn_ref = multi_attn_reference(params, x, attn_mask, non_pad_mask, head_num)

    # --- f32 parity path (matches the torch math to ~1e-5) ---
    out32, attn32 = multi_attn_forward(params, x, attn_mask, non_pad_mask,
                                       head_num, compute_dtype=jnp.float32)
    out32 = jax.block_until_ready(out32)
    attn32 = jax.block_until_ready(attn32)
    assert out32.shape == (B, L, H) and attn32.shape == (B * head_num, L, L)
    assert jnp.allclose(out32, out_ref, atol=1e-5, rtol=1e-5)
    assert jnp.allclose(attn32, attn_ref, atol=1e-5, rtol=1e-5)

    # --- bf16 MXU path (production default): looser tolerance vs f32 reference ---
    out16, attn16 = multi_attn_forward(params, x, attn_mask, non_pad_mask, head_num)
    out16 = jax.block_until_ready(out16)
    attn16 = jax.block_until_ready(attn16)
    assert out16.shape == (B, L, H) and attn16.shape == (B * head_num, L, L)
    assert jnp.allclose(out16, out_ref, atol=6e-2, rtol=6e-2)
    assert jnp.allclose(attn16, attn_ref, atol=6e-2, rtol=6e-2)

    print("KERNEL_OK")
</pallas_src>

<mosaic_0001>
module attributes {stable_mosaic.version = 11 : i64} {
  func.func @_qkv_proj_kernel(%arg0: i32, %arg1: i32, %arg2: memref<16x32xf32, #tpu.memory_space<vmem>>, %arg3: memref<32x96xf32, #tpu.memory_space<vmem>>, %arg4: memref<1x96xf32, #tpu.memory_space<vmem>>, %arg5: memref<16x96xf32, #tpu.memory_space<vmem>>) attributes {dimension_semantics = [#tpu.dimension_semantics<parallel>, #tpu.dimension_semantics<parallel>], iteration_bounds = array<i64: 1, 1>, scalar_prefetch = 0 : i64, scratch_operands = 0 : i64, tpu.core_type = #tpu.core_type<tc>, window_params = [{transform_indices = @transform_0, window_bounds = array<i64: 16, 32>}, {transform_indices = @transform_1, window_bounds = array<i64: 32, 96>}, {transform_indices = @transform_2, window_bounds = array<i64: 1, 96>}, {transform_indices = @transform_3, window_bounds = array<i64: 16, 96>}]} {
    %c0 = arith.constant 0 : index
    %c0_0 = arith.constant 0 : index
    %0 = vector.load %arg2[%c0, %c0_0] : memref<16x32xf32, #tpu.memory_space<vmem>>, vector<16x32xf32>
    %c0_1 = arith.constant 0 : index
    %c0_2 = arith.constant 0 : index
    %1 = vector.load %arg3[%c0_1, %c0_2] : memref<32x96xf32, #tpu.memory_space<vmem>>, vector<32x96xf32>
    %cst = arith.constant dense<0.000000e+00> : vector<16x96xf32>
    %2 = tpu.matmul %0, %1, %cst {dimension_numbers = #tpu.dot_dimension_numbers<[1], [0], [0], [1], [0, 0, 1, 1], [], []>} : vector<16x32xf32>, vector<32x96xf32>, vector<16x96xf32> -> vector<16x96xf32>
    %c0_3 = arith.constant 0 : index
    %c0_4 = arith.constant 0 : index
    %3 = vector.load %arg4[%c0_3, %c0_4] : memref<1x96xf32, #tpu.memory_space<vmem>>, vector<1x96xf32>
    %4 = vector.broadcast %3 : vector<1x96xf32> to vector<16x96xf32>
    %5 = arith.addf %2, %4 : vector<16x96xf32>
    %c0_5 = arith.constant 0 : index
    %c0_6 = arith.constant 0 : index
    %6 = vector.load %arg5[%c0_5, %c0_6] : memref<16x96xf32, #tpu.memory_space<vmem>>, vector<16x96xf32>
    tpu.vector_store %arg5[%c0_5, %c0_6], %5 {strides = array<i32>} : memref<16x96xf32, #tpu.memory_space<vmem>>, vector<16x96xf32>,
    return
  }
  func.func @transform_0(%arg0: i32, %arg1: i32) -> (i32, i32) {
    %c0_i32 = arith.constant 0 : i32
    %c0_i32_0 = arith.constant 0 : i32
    return %arg0, %c0_i32 : i32, i32
  }
  func.func @transform_1(%arg0: i32, %arg1: i32) -> (i32, i32) {
    %c0_i32 = arith.constant 0 : i32
    %c0_i32_0 = arith.constant 0 : i32
    return %c0_i32, %arg1 : i32, i32
  }
  func.func @transform_2(%arg0: i32, %arg1: i32) -> (i32, i32) {
    %c0_i32 = arith.constant 0 : i32
    %c0_i32_0 = arith.constant 0 : i32
    return %c0_i32, %arg1 : i32, i32
  }
  func.func @transform_3(%arg0: i32, %arg1: i32) -> (i32, i32) {
    %c0_i32 = arith.constant 0 : i32
    return %arg0, %arg1 : i32, i32
  }
}

</mosaic_0001>

<llo_original>
// kernel: tpu_custom_call.1
$region0: #{tpu_custom_call.1}
  #allocation0 [shape = 'u32[]', space=smem, size = 0x4, offset = 0x4, fixed_abs, tag = 'smem constant byte address 0x4 - core index']
  #allocation1 [shape = 'u32[144,128]{1,0:T(1,128)}', space=vmem, size = 0x12000, scoped, tag = 'internal scratch']
  %s0 = inlined_call_operand.hbm [shape: f32[16,32], index: 0, kind: input, shape index: {}]
  %s1 = inlined_call_operand.hbm [shape: f32[32,96], index: 1, kind: input, shape index: {}]
  %s2 = inlined_call_operand.hbm [shape: f32[1,96], index: 2, kind: input, shape index: {}]
  %s3 = inlined_call_operand.hbm [shape: f32[16,96], index: 3, kind: output, shape index: {}]
  %s4 = sld [smem:[#allocation0]]
  $region34: #{tpu_custom_call.1} parent=0
    _
  %s6 = ssub.s32 1, %s4
  %s7 = scalar_select 0, %s6, %s4
  $region1: #{tpu_custom_call.1} parent=0
    #allocation2 [shape = 'u8[8192]{0}', space=vmem, size = 0x2000, scoped, tag = 'input window, operand 0, single buffered']
    #allocation3 [shape = 's32[1]{0}', space=sflag, size = 0x4, scoped, tag = 'scoped memory for tpu_custom_call.1']
    #allocation4 [shape = 's32[1]{0}', space=sflag, size = 0x4, scoped, tag = 'scoped memory for tpu_custom_call.1']
    #allocation5 [shape = 'u8[16384]{0}', space=vmem, size = 0x4000, scoped, tag = 'input window, operand 1, single buffered']
    #allocation6 [shape = 's32[1]{0}', space=sflag, size = 0x4, scoped, tag = 'scoped memory for tpu_custom_call.1']
    #allocation7 [shape = 'u8[512]{0}', space=vmem, size = 0x400, scoped, tag = 'input window, operand 2, single buffered']
    #allocation8 [shape = 'u8[8192]{0}', space=vmem, size = 0x2000, scoped, tag = 'output window, operand 0, single buffered']
    %8 = vsyncpa [#allocation3], 0
    %9 = vsyncpa [#allocation6], 0
    %10 = vsyncpa [#allocation4], 0
    // Predicated region
    $region2: #{tpu_custom_call.1} parent=1 // pred_check
      _
    $region3: #{tpu_custom_call.1} parent=1 // pred_check_branch
      %12 = sbr.rel (0) target = $region5
    $region4: #{tpu_custom_call.1} parent=1 // pred_region
      %s14 = ssub.s32 256, 256
      %15 = vsyncadd [#allocation3], %s14
      %s16 = sshll.u32 [#allocation2], 4
      %s17 = int_to_ptr.vmem [resolvable:$true] %s16
      %22 = dma.hbm_to_vmem [thread:$0]  %s0, 256, %s17, [#allocation3], 128, 128, 8
    $region5: #{tpu_custom_call.1} parent=1 // pred_fallthru
      _
    // Predicated region
    $region6: #{tpu_custom_call.1} parent=1 // pred_check
      _
    $region7: #{tpu_custom_call.1} parent=1 // pred_check_branch
      %24 = sbr.rel (0) target = $region9
    $region8: #{tpu_custom_call.1} parent=1 // pred_region
      %s26 = ssub.s32 512, 512
      %27 = vsyncadd [#allocation6], %s26
      %s28 = sshll.u32 [#allocation5], 4
      %s29 = int_to_ptr.vmem [resolvable:$true] %s28
      %34 = dma.hbm_to_vmem [thread:$0]  %s1, 512, %s29, [#allocation6], 128, 128, 8
    $region9: #{tpu_custom_call.1} parent=1 // pred_fallthru
      _
    // Predicated region
    $region10: #{tpu_custom_call.1} parent=1 // pred_check
      _
    $region11: #{tpu_custom_call.1} parent=1 // pred_check_branch
      %36 = sbr.rel (0) target = $region13
    $region12: #{tpu_custom_call.1} parent=1 // pred_region
      %s38 = ssub.s32 16, 16
      %39 = vsyncadd [#allocation6], %s38
      %s41 = sshll.u32 [#allocation7], 4
      %s42 = int_to_ptr.vmem [resolvable:$true] %s41
      %44 = dma.hbm_to_vmem [thread:$0]  %s2, 16, %s42, [#allocation6]
    $region13: #{tpu_custom_call.1} parent=1 // pred_fallthru
      _
    // Predicated region
    $region14: #{tpu_custom_call.1} parent=1 // pred_check
      _
    $region15: #{tpu_custom_call.1} parent=1 // pred_check_branch
      %46 = sbr.rel (0) target = $region17
    $region16: #{tpu_custom_call.1} parent=1 // pred_region
      %47 = dma.done [#allocation3], 256
    $region17: #{tpu_custom_call.1} parent=1 // pred_fallthru
      _
    // Predicated region
    $region18: #{tpu_custom_call.1} parent=1 // pred_check
      _
    $region19: #{tpu_custom_call.1} parent=1 // pred_check_branch
      %49 = sbr.rel (0) target = $region21
    $region20: #{tpu_custom_call.1} parent=1 // pred_region
      %50 = dma.done [#allocation6], 512
    $region21: #{tpu_custom_call.1} parent=1 // pred_fallthru
      _
    // Predicated region
    $region22: #{tpu_custom_call.1} parent=1 // pred_check
      _
    $region23: #{tpu_custom_call.1} parent=1 // pred_check_branch
      %52 = sbr.rel (0) target = $region25
    $region24: #{tpu_custom_call.1} parent=1 // pred_region
      %53 = dma.done [#allocation6], 16
    $region25: #{tpu_custom_call.1} parent=1 // pred_fallthru
      _
    %v54 = vld [vmem:[#allocation2] sm:$0xff]
    %v55 = vld [vmem:[#allocation2 + $0x8] sm:$0xff]
    %v56 = vld [vmem:[#allocation5] sm:$0xff]
    %v57 = vld [vmem:[#allocation5 + $0x8] sm:$0xff]
    %v58 = vld [vmem:[#allocation5 + $0x10] sm:$0xff]
    %v59 = vld [vmem:[#allocation5 + $0x18] sm:$0xff]
    %v60 = vld [vmem:[#allocation7] sm:$0x1]
    %v62 = vlaneseq
    %v63 = vshrl.u32 %v62, 7
    %v64 = vsub.s32 0, %v63
    %v65 = vrot.slane %v60, %v64
    %vm67 = vcmask 261120
    %v69 = vsel %vm67, %v54, 0
    %v72 = vsel %vm67, %v55, 0
    %74 = vmatprep.subr.mxu0 0.0
    %75 = vmatpush1.msra.mxu0 %v56
    %76 = vmatprep.subr.mxu0 0.0
    %77 = vmatpush1.msra.mxu0 %v57
    %78 = vmatprep.subr.mxu0 0.0
    %79 = vmatpush1.msra.mxu0 %v58
    %80 = vmatprep.subr.mxu0 0.0
    %81 = vmatpush1.msra.mxu0 %v59
    %82 = vmatprep.subr.mxu0 0.0
    %83 = vmatpush1.msra.mxu0 0.0
    %84 = vmatprep.subr.mxu0 0.0
    %85 = vmatpush1.msra.mxu0 0.0
    %86 = vmatprep.subr.mxu0 0.0
    %87 = vmatpush1.msra.mxu0 0.0
    %88 = vmatprep.subr.mxu0 0.0
    %89 = vmatpush1.msra.mxu0 0.0
    %90 = vmatprep.subr.mxu0 0.0
    %91 = vmatpush1.msra.mxu0 0.0
    %92 = vmatprep.subr.mxu0 0.0
    %93 = vmatpush1.msra.mxu0 0.0
    %94 = vmatprep.subr.mxu0 0.0
    %95 = vmatpush1.msra.mxu0 0.0
    %96 = vmatprep.subr.mxu0 0.0
    %97 = vmatpush1.msra.mxu0 0.0
    %98 = vmatprep.subr.mxu0 0.0
    %99 = vmatpush1.msra.mxu0 0.0
    %100 = vmatprep.subr.mxu0 0.0
    %101 = vmatpush1.msra.mxu0 0.0
    %102 = vmatprep.subr.mxu0 0.0
    %103 = vmatpush1.msra.mxu0 0.0
    %104 = vmatprep.subr.mxu0 0.0
    %105 = vmatpush1.msra.mxu0 0.0
    %106 = vmatprep.subr.mxu0 0.0
    %107 = vmatpush1.msra.mxu0 0.0
    %108 = vmatprep.subr.mxu0 0.0
    %109 = vmatpush1.msra.mxu0 0.0
    %110 = vmatprep.subr.mxu0 0.0
    %111 = vmatpush1.msra.mxu0 0.0
    %112 = vmatprep.subr.mxu0 0.0
    %113 = vmatpush1.msra.mxu0 0.0
    %114 = vmatprep.subr.mxu0 0.0
    %115 = vmatpush1.msra.mxu0 0.0
    %116 = vmatprep.subr.mxu0 0.0
    %117 = vmatpush1.msra.mxu0 0.0
    %118 = vmatprep.subr.mxu0 0.0
    %119 = vmatpush1.msra.mxu0 0.0
    %120 = vmatprep.subr.mxu0 0.0
    %121 = vmatpush1.msra.mxu0 0.0
    %122 = vmatprep.subr.mxu0 0.0
    %123 = vmatpush1.msra.mxu0 0.0
    %124 = vmatprep.subr.mxu0 0.0
    %125 = vmatpush1.msra.mxu0 0.0
    %126 = vmatprep.subr.mxu0 0.0
    %127 = vmatpush1.msra.mxu0 0.0
    %128 = vmatprep.subr.mxu0 0.0
    %129 = vmatpush1.msra.mxu0 0.0
    %130 = vmatprep.subr.mxu0 0.0
    %131 = vmatpush1.msra.mxu0 0.0
    %132 = vmatprep.subr.mxu0 0.0
    %133 = vmatpush1.msra.mxu0 0.0
    %134 = vmatprep.subr.mxu0 0.0
    %135 = vmatpush1.msra.mxu0 0.0
    %136 = vmatprep.subr.mxu0 0.0
    %137 = vmatpush1.msra.mxu0 0.0
    %138 = vmatprep.mubr.f32.mxu0 0.0
    %139 = vmatmul.mubr.f32.gmra.mrb[0].mxu0 %v69
    %v140 = vpop.f32.mrb[0].mxu0
    %v141 = vadd.f32 %v65, %v140
    %v142 = vpop.f32.mrb[0].mxu0
    %143 = vmatprep.mubr.f32.mxu0 0.0
    %144 = vmatmul.mubr.f32.gmra.mrb[0].mxu0 %v72
    %v145 = vpop.f32.mrb[0].mxu0
    %v146 = vadd.f32 %v65, %v145
    %v147 = vpop.f32.mrb[0].mxu0
    %148 = vdwg.mxu0
    %vm149 = vcmask 785408
    %150 = vst.msk [vmem:[#allocation8] sm:$0xff] %vm149, %v141
    %151 = vst.msk [vmem:[#allocation8 + $0x8] sm:$0xff] %vm149, %v146
    // Predicated region
    $region26: #{tpu_custom_call.1} parent=1 // pred_check
      _
    $region27: #{tpu_custom_call.1} parent=1 // pred_check_branch
      %153 = sbr.rel (0) target = $region29
    $region28: #{tpu_custom_call.1} parent=1 // pred_region
      %s155 = ssub.s32 256, 256
      %156 = vsyncadd [#allocation4], %s155
      %s157 = sshll.u32 [#allocation8], 4
      %s158 = int_to_ptr.vmem [resolvable:$true] %s157
      %163 = dma.vmem_to_hbm [thread:$0]  %s158, 256, %s3, [#allocation4], 128, 128, 8
    $region29: #{tpu_custom_call.1} parent=1 // pred_fallthru
      _
    // Predicated region
    $region30: #{tpu_custom_call.1} parent=1 // pred_check
      _
    $region31: #{tpu_custom_call.1} parent=1 // pred_check_branch
      %165 = sbr.rel (0) target = $region33
    $region32: #{tpu_custom_call.1} parent=1 // pred_region
      %166 = dma.done [#allocation4], 256
    $region33: #{tpu_custom_call.1} parent=1 // pred_fallthru
      _
    %167 = vsyncpa [#allocation3], 1
    %168 = vsyncpa [#allocation6], 1
    %169 = vsyncpa [#allocation4], 1

</llo_original>
